<compile_context>
chip_gen: v7x
topology: tpu7x:2x2x1
jax: 0.10.0
libtpu: 0.0.40
codegen_flags: <defaults>
</compile_context>

<pallas_src>
import jax
import jax.numpy as jnp
from jax.experimental import pallas as pl
from jax.experimental.pallas import tpu as pltpu

HIDDEN_SIZES = [20, 20]

LANE = 128
SUBLANE = 8


def _round_up(x, m):
    return ((x + m - 1) // m) * m


def _pad_cols(a, n):
    return a if a.shape[1] >= n else jnp.pad(a, ((0, 0), (0, n - a.shape[1])))


def _pad_rows(a, n):
    return a if a.shape[0] >= n else jnp.pad(a, ((0, n - a.shape[0]), (0, 0)))


def qnetwork_kernel(x_ref, w1_ref, b1_ref, w2_ref, b2_ref, w3_ref, b3_ref, out_ref):
    x = x_ref[...]                                               # (TB, S)

    # fc1 + relu1
    h1 = jnp.dot(x, w1_ref[...], preferred_element_type=jnp.float32) + b1_ref[...]
    h1 = jnp.maximum(h1, 0.0)

    # fc2 + relu2 (accumulate f32; bias/ReLU on the VPU in f32)
    h2 = jnp.dot(h1.astype(w2_ref.dtype), w2_ref[...],
                 preferred_element_type=jnp.float32) + b2_ref[...]
    h2 = jnp.maximum(h2, 0.0)

    # output layer (no activation); q is (TB, Ap) with Ap padded to 128 for the MXU.
    q = jnp.dot(h2.astype(w3_ref.dtype), w3_ref[...],
                preferred_element_type=jnp.float32) + b3_ref[...]

    # Store lane-dense over *batch*: transpose the padded result (both dims are
    # multiples of 128 -> well-aligned XLU transpose, off the VPU/MXU slots) and
    # keep only the first ASUB sublanes (real actions padded to 8).  The block
    # is (ASUB, TB) with TB on the lane axis -> unmasked full-lane vst and ~16x
    # less HBM writeback than the old (TB, 128) f32 store.
    q_t = q.T                                                    # (Ap, TB)
    out_ref[...] = q_t[: out_ref.shape[0], :].astype(out_ref.dtype)


def qnetwork_forward(state, params, *, tile_b=2048, use_bf16=False):
    """state: (B, state_size) f32; params: dict of w1,b1,w2,b2,w3,b3 (fan_in, fan_out).

    use_bf16=True casts state and weights to bf16 for the MXU feed (valid on
    v5e/v6e/v7x; accumulation stays f32). Note it quantizes the input state too.
    """
    w1, b1 = params["w1"], params["b1"]
    w2, b2 = params["w2"], params["b2"]
    w3, b3 = params["w3"], params["b3"]

    B, S = state.shape
    H1, H2, A = w1.shape[1], w2.shape[1], w3.shape[1]

    # Lane-dense padding of the N dims for the matmuls (exact: zero columns and
    # zero biases stay 0 through ReLU and are sliced off at the end).
    H1p = _round_up(H1, LANE)
    H2p = _round_up(H2, LANE)
    Ap = _round_up(A, LANE)
    ASUB = _round_up(A, SUBLANE)          # sublane-packed action dim of the output

    w1p = _pad_cols(w1, H1p)
    b1p = _pad_cols(b1, H1p)
    w2p = _pad_cols(_pad_rows(w2, H1p), H2p)
    b2p = _pad_cols(b2, H2p)
    w3p = _pad_cols(_pad_rows(w3, H2p), Ap)
    b3p = _pad_cols(b3, Ap)

    # Batch tiling.  TB is the lane axis of the output block, so it must be a
    # multiple of 128.  Large TB amortizes per-grid-step overhead; when the
    # batch spans >= 2 lane tiles we cap TB so the grid has >= 2 steps and the
    # "parallel" batch axis can be sharded across v7x's two TensorCores.
    B_lanes = _round_up(B, LANE)
    TB = max(LANE, min(_round_up(tile_b, LANE), B_lanes))
    if B_lanes >= 2 * LANE:
        TB = min(TB, _round_up(pl.cdiv(B_lanes, 2), LANE))
    Bp = pl.cdiv(B, TB) * TB
    xp = _pad_rows(state, Bp)

    if use_bf16:
        # bf16 MXU path on v5e/v6e/v7x; biases stay f32, accumulation stays f32.
        xp = xp.astype(jnp.bfloat16)
        w1p = w1p.astype(jnp.bfloat16)
        w2p = w2p.astype(jnp.bfloat16)
        w3p = w3p.astype(jnp.bfloat16)

    grid = (Bp // TB,)

    itemsize = 2 if use_bf16 else 4
    flops = 2 * Bp * (S * H1p + H1p * H2p + H2p * Ap)
    bytes_accessed = (
        Bp * S * itemsize                                   # input states
        + (w1p.size + w2p.size + w3p.size) * itemsize       # weights (read once)
        + (b1p.size + b2p.size + b3p.size) * 4              # biases
        + ASUB * Bp * 4                                     # packed transposed output
    )
    cost = pl.CostEstimate(flops=flops, transcendentals=0,
                           bytes_accessed=bytes_accessed)

    out = pl.pallas_call(
        qnetwork_kernel,
        out_shape=jax.ShapeDtypeStruct((ASUB, Bp), jnp.float32),
        grid=grid,
        in_specs=[
            pl.BlockSpec((TB, S), lambda i: (i, 0)),      # state: tiled over batch
            pl.BlockSpec((S, H1p), lambda i: (0, 0)),     # weights/biases: VMEM-resident
            pl.BlockSpec((1, H1p), lambda i: (0, 0)),
            pl.BlockSpec((H1p, H2p), lambda i: (0, 0)),
            pl.BlockSpec((1, H2p), lambda i: (0, 0)),
            pl.BlockSpec((H2p, Ap), lambda i: (0, 0)),
            pl.BlockSpec((1, Ap), lambda i: (0, 0)),
        ],
        # Output is (ASUB, Bp): batch on lanes, actions sublane-packed.
        out_specs=pl.BlockSpec((ASUB, TB), lambda i: (0, i)),
        compiler_params=pltpu.CompilerParams(
            dimension_semantics=("parallel",),            # v7x: 2 TCs share batch steps
        ),
        cost_estimate=cost,
    )(xp, w1p, b1p, w2p, b2p, w3p, b3p)

    # Slice off padding and transpose back to (B, A).
    return out[:A, :B].T


def init_params(key, state_size, action_size):
    """Deterministic init mimicking torch.nn.Linear (U[-1/sqrt(fan_in), 1/sqrt(fan_in)])."""
    dims = [state_size, HIDDEN_SIZES[0], HIDDEN_SIZES[1], action_size]
    params = {}
    keys = jax.random.split(key, 6)
    for i in range(3):
        fan_in, fan_out = dims[i], dims[i + 1]
        bound = 1.0 / jnp.sqrt(jnp.float32(fan_in))
        w = jax.random.uniform(keys[2 * i], (fan_in, fan_out), jnp.float32, -bound, bound)
        b = jax.random.uniform(keys[2 * i + 1], (1, fan_out), jnp.float32, -bound, bound)
        params[f"w{i + 1}"] = w
        params[f"b{i + 1}"] = b
    return params


def reference_forward(state, params):
    h1 = jnp.maximum(state @ params["w1"] + params["b1"], 0.0)
    h2 = jnp.maximum(h1 @ params["w2"] + params["b2"], 0.0)
    return h2 @ params["w3"] + params["b3"]


if __name__ == "__main__":
    key = jax.random.PRNGKey(0)
    k_params, k_state, k_state2 = jax.random.split(key, 3)

    state_size = 16
    action_size = 4
    params = init_params(k_params, state_size, action_size)

    # 1) Small DQN-style batch, f32 path (single grid step).
    batch = 8
    state = jax.random.normal(k_state, (batch, state_size), jnp.float32)
    q = jax.block_until_ready(qnetwork_forward(state, params))
    q_ref = reference_forward(state, params)
    assert q.shape == (batch, action_size)
    assert jnp.allclose(q, q_ref, atol=1e-5, rtol=1e-5)

    # 2) Larger ragged batch: exercises batch tiling, the >=2-grid-step cap
    #    (TB=256, Bp=512, grid=(2,)) and the packed transposed output store.
    batch2 = 300
    state2 = jax.random.normal(k_state2, (batch2, state_size), jnp.float32)
    q2 = jax.block_until_ready(qnetwork_forward(state2, params))
    q2_ref = reference_forward(state2, params)
    assert q2.shape == (batch2, action_size)
    assert jnp.allclose(q2, q2_ref, atol=1e-5, rtol=1e-5)

    # 3) bf16 MXU path (valid on v5e/v6e/v7x), f32 accumulation — looser tolerance.
    q3 = jax.block_until_ready(qnetwork_forward(state2, params, use_bf16=True))
    assert q3.shape == (batch2, action_size)
    assert jnp.allclose(q3, q2_ref, atol=5e-2, rtol=5e-2)

    print("KERNEL_OK")
</pallas_src>

<mosaic_0001>
module attributes {stable_mosaic.version = 11 : i64} {
  func.func @qnetwork_kernel(%arg0: i32, %arg1: memref<128x16xf32, #tpu.memory_space<vmem>>, %arg2: memref<16x128xf32, #tpu.memory_space<vmem>>, %arg3: memref<1x128xf32, #tpu.memory_space<vmem>>, %arg4: memref<128x128xf32, #tpu.memory_space<vmem>>, %arg5: memref<1x128xf32, #tpu.memory_space<vmem>>, %arg6: memref<128x128xf32, #tpu.memory_space<vmem>>, %arg7: memref<1x128xf32, #tpu.memory_space<vmem>>, %arg8: memref<8x128xf32, #tpu.memory_space<vmem>>) attributes {dimension_semantics = [#tpu.dimension_semantics<parallel>], iteration_bounds = array<i64: 1>, scalar_prefetch = 0 : i64, scratch_operands = 0 : i64, tpu.core_type = #tpu.core_type<tc>, window_params = [{transform_indices = @transform_0, window_bounds = array<i64: 128, 16>}, {pipeline_mode = #tpu.pipeline_mode<synchronous>, transform_indices = @transform_1, window_bounds = array<i64: 16, 128>}, {pipeline_mode = #tpu.pipeline_mode<synchronous>, transform_indices = @transform_2, window_bounds = array<i64: 1, 128>}, {pipeline_mode = #tpu.pipeline_mode<synchronous>, transform_indices = @transform_3, window_bounds = array<i64: 128, 128>}, {pipeline_mode = #tpu.pipeline_mode<synchronous>, transform_indices = @transform_4, window_bounds = array<i64: 1, 128>}, {pipeline_mode = #tpu.pipeline_mode<synchronous>, transform_indices = @transform_5, window_bounds = array<i64: 128, 128>}, {pipeline_mode = #tpu.pipeline_mode<synchronous>, transform_indices = @transform_6, window_bounds = array<i64: 1, 128>}, {transform_indices = @transform_7, window_bounds = array<i64: 8, 128>}]} {
    %c0 = arith.constant 0 : index
    %c0_0 = arith.constant 0 : index
    %0 = vector.load %arg1[%c0, %c0_0] : memref<128x16xf32, #tpu.memory_space<vmem>>, vector<128x16xf32>
    %c0_1 = arith.constant 0 : index
    %c0_2 = arith.constant 0 : index
    %1 = vector.load %arg2[%c0_1, %c0_2] : memref<16x128xf32, #tpu.memory_space<vmem>>, vector<16x128xf32>
    %cst = arith.constant dense<0.000000e+00> : vector<128x128xf32>
    %2 = tpu.matmul %0, %1, %cst {dimension_numbers = #tpu.dot_dimension_numbers<[1], [0], [0], [1], [0, 0, 1, 1], [], []>} : vector<128x16xf32>, vector<16x128xf32>, vector<128x128xf32> -> vector<128x128xf32>
    %c0_3 = arith.constant 0 : index
    %c0_4 = arith.constant 0 : index
    %3 = vector.load %arg3[%c0_3, %c0_4] : memref<1x128xf32, #tpu.memory_space<vmem>>, vector<1x128xf32>
    %4 = vector.broadcast %3 : vector<1x128xf32> to vector<128x128xf32>
    %5 = arith.addf %2, %4 : vector<128x128xf32>
    %cst_5 = arith.constant 0.000000e+00 : f32
    %6 = vector.broadcast %cst_5 : f32 to vector<128x128xf32>
    %7 = arith.maximumf %5, %6 : vector<128x128xf32>
    %c0_6 = arith.constant 0 : index
    %c0_7 = arith.constant 0 : index
    %8 = vector.load %arg4[%c0_6, %c0_7] : memref<128x128xf32, #tpu.memory_space<vmem>>, vector<128x128xf32>
    %cst_8 = arith.constant dense<0.000000e+00> : vector<128x128xf32>
    %9 = tpu.matmul %7, %8, %cst_8 {dimension_numbers = #tpu.dot_dimension_numbers<[1], [0], [0], [1], [0, 0, 1, 1], [], []>} : vector<128x128xf32>, vector<128x128xf32>, vector<128x128xf32> -> vector<128x128xf32>
    %c0_9 = arith.constant 0 : index
    %c0_10 = arith.constant 0 : index
    %10 = vector.load %arg5[%c0_9, %c0_10] : memref<1x128xf32, #tpu.memory_space<vmem>>, vector<1x128xf32>
    %11 = vector.broadcast %10 : vector<1x128xf32> to vector<128x128xf32>
    %12 = arith.addf %9, %11 : vector<128x128xf32>
    %cst_11 = arith.constant 0.000000e+00 : f32
    %13 = vector.broadcast %cst_11 : f32 to vector<128x128xf32>
    %14 = arith.maximumf %12, %13 : vector<128x128xf32>
    %c0_12 = arith.constant 0 : index
    %c0_13 = arith.constant 0 : index
    %15 = vector.load %arg6[%c0_12, %c0_13] : memref<128x128xf32, #tpu.memory_space<vmem>>, vector<128x128xf32>
    %cst_14 = arith.constant dense<0.000000e+00> : vector<128x128xf32>
    %16 = tpu.matmul %14, %15, %cst_14 {dimension_numbers = #tpu.dot_dimension_numbers<[1], [0], [0], [1], [0, 0, 1, 1], [], []>} : vector<128x128xf32>, vector<128x128xf32>, vector<128x128xf32> -> vector<128x128xf32>
    %c0_15 = arith.constant 0 : index
    %c0_16 = arith.constant 0 : index
    %17 = vector.load %arg7[%c0_15, %c0_16] : memref<1x128xf32, #tpu.memory_space<vmem>>, vector<1x128xf32>
    %18 = vector.broadcast %17 : vector<1x128xf32> to vector<128x128xf32>
    %19 = arith.addf %16, %18 : vector<128x128xf32>
    %20 = tpu.transpose %19, [1, 0] : vector<128x128xf32> -> vector<128x128xf32>
    %21 = vector.extract_strided_slice %20 {offsets = [0, 0], sizes = [8, 128], strides = [1, 1]} : vector<128x128xf32> to vector<8x128xf32>
    %c0_17 = arith.constant 0 : index
    %c0_18 = arith.constant 0 : index
    %22 = vector.load %arg8[%c0_17, %c0_18] : memref<8x128xf32, #tpu.memory_space<vmem>>, vector<8x128xf32>
    tpu.vector_store %arg8[%c0_17, %c0_18], %21 {strides = array<i32>} : memref<8x128xf32, #tpu.memory_space<vmem>>, vector<8x128xf32>,
    return
  }
  func.func @transform_0(%arg0: i32) -> (i32, i32) {
    %c0_i32 = arith.constant 0 : i32
    %c0_i32_0 = arith.constant 0 : i32
    return %arg0, %c0_i32 : i32, i32
  }
  func.func @transform_1(%arg0: i32) -> (i32, i32) {
    %c0_i32 = arith.constant 0 : i32
    %c0_i32_0 = arith.constant 0 : i32
    %c0_i32_1 = arith.constant 0 : i32
    return %c0_i32, %c0_i32_0 : i32, i32
  }
  func.func @transform_2(%arg0: i32) -> (i32, i32) {
    %c0_i32 = arith.constant 0 : i32
    %c0_i32_0 = arith.constant 0 : i32
    %c0_i32_1 = arith.constant 0 : i32
    return %c0_i32, %c0_i32_0 : i32, i32
  }
  func.func @transform_3(%arg0: i32) -> (i32, i32) {
    %c0_i32 = arith.constant 0 : i32
    %c0_i32_0 = arith.constant 0 : i32
    %c0_i32_1 = arith.constant 0 : i32
    return %c0_i32, %c0_i32_0 : i32, i32
  }
  func.func @transform_4(%arg0: i32) -> (i32, i32) {
    %c0_i32 = arith.constant 0 : i32
    %c0_i32_0 = arith.constant 0 : i32
    %c0_i32_1 = arith.constant 0 : i32
    return %c0_i32, %c0_i32_0 : i32, i32
  }
  func.func @transform_5(%arg0: i32) -> (i32, i32) {
    %c0_i32 = arith.constant 0 : i32
    %c0_i32_0 = arith.constant 0 : i32
    %c0_i32_1 = arith.constant 0 : i32
    return %c0_i32, %c0_i32_0 : i32, i32
  }
  func.func @transform_6(%arg0: i32) -> (i32, i32) {
    %c0_i32 = arith.constant 0 : i32
    %c0_i32_0 = arith.constant 0 : i32
    %c0_i32_1 = arith.constant 0 : i32
    return %c0_i32, %c0_i32_0 : i32, i32
  }
  func.func @transform_7(%arg0: i32) -> (i32, i32) {
    %c0_i32 = arith.constant 0 : i32
    %c0_i32_0 = arith.constant 0 : i32
    return %c0_i32, %arg0 : i32, i32
  }
}

</mosaic_0001>

<llo_original>
// kernel: tpu_custom_call.1
$region0: #{tpu_custom_call.1}
  #allocation0 [shape = 'u32[]', space=smem, size = 0x4, offset = 0x4, fixed_abs, tag = 'smem constant byte address 0x4 - core index']
  #allocation1 [shape = 'u32[144,128]{1,0:T(1,128)}', space=vmem, size = 0x12000, scoped, tag = 'internal scratch']
  %s0 = inlined_call_operand.vmem [shape: f32[128,16], index: 0, kind: input, shape index: {}]
  %s1 = inlined_call_operand.vmem [shape: f32[16,128], index: 1, kind: input, shape index: {}]
  %s2 = inlined_call_operand.vmem [shape: f32[1,128], index: 2, kind: input, shape index: {}]
  %s3 = inlined_call_operand.vmem [shape: f32[128,128], index: 3, kind: input, shape index: {}]
  %s4 = inlined_call_operand.vmem [shape: f32[1,128], index: 4, kind: input, shape index: {}]
  %s5 = inlined_call_operand.hbm [shape: f32[128,128], index: 5, kind: input, shape index: {}]
  %s6 = inlined_call_operand.vmem [shape: f32[1,128], index: 6, kind: input, shape index: {}]
  %s7 = inlined_call_operand.hbm [shape: f32[8,128], index: 7, kind: output, shape index: {}]
  %s8 = sld [smem:[#allocation0]]
  $region42: #{tpu_custom_call.1} parent=0
    _
  %s10 = ssub.s32 1, %s8
  %s11 = scalar_select 0, %s10, %s8
  $region1: #{tpu_custom_call.1} parent=0
    #allocation2 [shape = 'u8[65536]{0}', space=vmem, size = 0x10000, scoped, tag = 'input window, operand 5, single buffered']
    #allocation3 [shape = 's32[1]{0}', space=sflag, size = 0x4, scoped, tag = 'scoped memory for tpu_custom_call.1']
    #allocation4 [shape = 's32[1]{0}', space=sflag, size = 0x4, scoped, tag = 'scoped memory for tpu_custom_call.1']
    #allocation5 [shape = 'u8[4096]{0}', space=vmem, size = 0x1000, scoped, tag = 'output window, operand 0, single buffered']
    %12 = vsyncpa [#allocation3], 0
    %13 = vsyncpa [#allocation4], 0
    // Predicated region
    $region2: #{tpu_custom_call.1} parent=1 // pred_check
      _
    $region3: #{tpu_custom_call.1} parent=1 // pred_check_branch
      %15 = sbr.rel (0) target = $region5
    $region4: #{tpu_custom_call.1} parent=1 // pred_region
      _
    $region5: #{tpu_custom_call.1} parent=1 // pred_fallthru
      _
    // Predicated region
    $region6: #{tpu_custom_call.1} parent=1 // pred_check
      _
    $region7: #{tpu_custom_call.1} parent=1 // pred_check_branch
      %17 = sbr.rel (0) target = $region9
    $region8: #{tpu_custom_call.1} parent=1 // pred_region
      _
    $region9: #{tpu_custom_call.1} parent=1 // pred_fallthru
      _
    // Predicated region
    $region10: #{tpu_custom_call.1} parent=1 // pred_check
      _
    $region11: #{tpu_custom_call.1} parent=1 // pred_check_branch
      %19 = sbr.rel (0) target = $region13
    $region12: #{tpu_custom_call.1} parent=1 // pred_region
      _
    $region13: #{tpu_custom_call.1} parent=1 // pred_fallthru
      _
    // Predicated region
    $region14: #{tpu_custom_call.1} parent=1 // pred_check
      _
    $region15: #{tpu_custom_call.1} parent=1 // pred_check_branch
      %21 = sbr.rel (0) target = $region17
    $region16: #{tpu_custom_call.1} parent=1 // pred_region
      _
    $region17: #{tpu_custom_call.1} parent=1 // pred_fallthru
      _
    // Predicated region
    $region18: #{tpu_custom_call.1} parent=1 // pred_check
      _
    $region19: #{tpu_custom_call.1} parent=1 // pred_check_branch
      %23 = sbr.rel (0) target = $region21
    $region20: #{tpu_custom_call.1} parent=1 // pred_region
      _
    $region21: #{tpu_custom_call.1} parent=1 // pred_fallthru
      _
    // Predicated region
    $region22: #{tpu_custom_call.1} parent=1 // pred_check
      _
    $region23: #{tpu_custom_call.1} parent=1 // pred_check_branch
      %25 = sbr.rel (0) target = $region25
    $region24: #{tpu_custom_call.1} parent=1 // pred_region
      %s27 = ssub.s32 2048, 2048
      %28 = vsyncadd [#allocation3], %s27
      %s29 = sshll.u32 [#allocation2], 4
      %s30 = int_to_ptr.vmem [resolvable:$true] %s29
      %35 = dma.hbm_to_vmem [thread:$0]  %s5, 2048, %s30, [#allocation3], 128, 128, 8
    $region25: #{tpu_custom_call.1} parent=1 // pred_fallthru
      _
    // Predicated region
    $region26: #{tpu_custom_call.1} parent=1 // pred_check
      _
    $region27: #{tpu_custom_call.1} parent=1 // pred_check_branch
      %37 = sbr.rel (0) target = $region29
    $region28: #{tpu_custom_call.1} parent=1 // pred_region
      _
    $region29: #{tpu_custom_call.1} parent=1 // pred_fallthru
      _
    // Predicated region
    $region30: #{tpu_custom_call.1} parent=1 // pred_check
      _
    $region31: #{tpu_custom_call.1} parent=1 // pred_check_branch
      %39 = sbr.rel (0) target = $region33
    $region32: #{tpu_custom_call.1} parent=1 // pred_region
      %40 = dma.done [#allocation3], 2048
    $region33: #{tpu_custom_call.1} parent=1 // pred_fallthru
      _
    %v41 = vld [vmem:[%s0] sm:$0xff]
    %v42 = vld [vmem:[%s0 + $0x8] sm:$0xff]
    %v43 = vld [vmem:[%s0 + $0x10] sm:$0xff]
    %v44 = vld [vmem:[%s0 + $0x18] sm:$0xff]
    %v45 = vld [vmem:[%s0 + $0x20] sm:$0xff]
    %v46 = vld [vmem:[%s0 + $0x28] sm:$0xff]
    %v47 = vld [vmem:[%s0 + $0x30] sm:$0xff]
    %v48 = vld [vmem:[%s0 + $0x38] sm:$0xff]
    %v49 = vld [vmem:[%s0 + $0x40] sm:$0xff]
    %v50 = vld [vmem:[%s0 + $0x48] sm:$0xff]
    %v51 = vld [vmem:[%s0 + $0x50] sm:$0xff]
    %v52 = vld [vmem:[%s0 + $0x58] sm:$0xff]
    %v53 = vld [vmem:[%s0 + $0x60] sm:$0xff]
    %v54 = vld [vmem:[%s0 + $0x68] sm:$0xff]
    %v55 = vld [vmem:[%s0 + $0x70] sm:$0xff]
    %v56 = vld [vmem:[%s0 + $0x78] sm:$0xff]
    %v57 = vld [vmem:[%s1] sm:$0xff]
    %v58 = vld [vmem:[%s1 + $0x8] sm:$0xff]
    %v59 = vld [vmem:[%s2] sm:$0x1]
    %v61 = vlaneseq
    %v62 = vshrl.u32 %v61, 7
    %v63 = vsub.s32 0, %v62
    %v64 = vrot.slane %v59, %v63
    %vm66 = vcmask 130048
    %v68 = vsel %vm66, %v41, 0
    %v71 = vsel %vm66, %v42, 0
    %v74 = vsel %vm66, %v43, 0
    %v77 = vsel %vm66, %v44, 0
    %v80 = vsel %vm66, %v45, 0
    %v83 = vsel %vm66, %v46, 0
    %v86 = vsel %vm66, %v47, 0
    %v89 = vsel %vm66, %v48, 0
    %v92 = vsel %vm66, %v49, 0
    %v95 = vsel %vm66, %v50, 0
    %v98 = vsel %vm66, %v51, 0
    %v101 = vsel %vm66, %v52, 0
    %v104 = vsel %vm66, %v53, 0
    %v107 = vsel %vm66, %v54, 0
    %v110 = vsel %vm66, %v55, 0
    %v113 = vsel %vm66, %v56, 0
    %115 = vmatprep.subr.mxu0 0.0
    %116 = vmatpush1.msra.mxu0 %v57
    %117 = vmatprep.subr.mxu0 0.0
    %118 = vmatpush1.msra.mxu0 %v58
    %119 = vmatprep.subr.mxu0 0.0
    %120 = vmatpush1.msra.mxu0 0.0
    %121 = vmatprep.subr.mxu0 0.0
    %122 = vmatpush1.msra.mxu0 0.0
    %123 = vmatprep.subr.mxu0 0.0
    %124 = vmatpush1.msra.mxu0 0.0
    %125 = vmatprep.subr.mxu0 0.0
    %126 = vmatpush1.msra.mxu0 0.0
    %127 = vmatprep.subr.mxu0 0.0
    %128 = vmatpush1.msra.mxu0 0.0
    %129 = vmatprep.subr.mxu0 0.0
    %130 = vmatpush1.msra.mxu0 0.0
    %131 = vmatprep.subr.mxu0 0.0
    %132 = vmatpush1.msra.mxu0 0.0
    %133 = vmatprep.subr.mxu0 0.0
    %134 = vmatpush1.msra.mxu0 0.0
    %135 = vmatprep.subr.mxu0 0.0
    %136 = vmatpush1.msra.mxu0 0.0
    %137 = vmatprep.subr.mxu0 0.0
    %138 = vmatpush1.msra.mxu0 0.0
    %139 = vmatprep.subr.mxu0 0.0
    %140 = vmatpush1.msra.mxu0 0.0
    %141 = vmatprep.subr.mxu0 0.0
    %142 = vmatpush1.msra.mxu0 0.0
    %143 = vmatprep.subr.mxu0 0.0
    %144 = vmatpush1.msra.mxu0 0.0
    %145 = vmatprep.subr.mxu0 0.0
    %146 = vmatpush1.msra.mxu0 0.0
    %147 = vmatprep.subr.mxu0 0.0
    %148 = vmatpush1.msra.mxu0 0.0
    %149 = vmatprep.subr.mxu0 0.0
    %150 = vmatpush1.msra.mxu0 0.0
    %151 = vmatprep.subr.mxu0 0.0
    %152 = vmatpush1.msra.mxu0 0.0
    %153 = vmatprep.subr.mxu0 0.0
    %154 = vmatpush1.msra.mxu0 0.0
    %155 = vmatprep.subr.mxu0 0.0
    %156 = vmatpush1.msra.mxu0 0.0
    %157 = vmatprep.subr.mxu0 0.0
    %158 = vmatpush1.msra.mxu0 0.0
    %159 = vmatprep.subr.mxu0 0.0
    %160 = vmatpush1.msra.mxu0 0.0
    %161 = vmatprep.subr.mxu0 0.0
    %162 = vmatpush1.msra.mxu0 0.0
    %163 = vmatprep.subr.mxu0 0.0
    %164 = vmatpush1.msra.mxu0 0.0
    %165 = vmatprep.subr.mxu0 0.0
    %166 = vmatpush1.msra.mxu0 0.0
    %167 = vmatprep.subr.mxu0 0.0
    %168 = vmatpush1.msra.mxu0 0.0
    %169 = vmatprep.subr.mxu0 0.0
    %170 = vmatpush1.msra.mxu0 0.0
    %171 = vmatprep.subr.mxu0 0.0
    %172 = vmatpush1.msra.mxu0 0.0
    %173 = vmatprep.subr.mxu0 0.0
    %174 = vmatpush1.msra.mxu0 0.0
    %175 = vmatprep.subr.mxu0 0.0
    %176 = vmatpush1.msra.mxu0 0.0
    %177 = vmatprep.subr.mxu0 0.0
    %178 = vmatpush1.msra.mxu0 0.0
    %179 = vmatprep.mubr.f32.mxu0 0.0
    %180 = vmatmul.mubr.f32.gmra.mrb[0].mxu0 %v68
    %v181 = vpop.f32.mrb[0].mxu0
    %v182 = vadd.f32 %v64, %v181
    %v183 = vpop.f32.mrb[0].mxu0
    %184 = vmatprep.mubr.f32.mxu0 0.0
    %185 = vmatmul.mubr.f32.gmra.mrb[0].mxu0 %v71
    %v186 = vpop.f32.mrb[0].mxu0
    %v187 = vadd.f32 %v64, %v186
    %v188 = vpop.f32.mrb[0].mxu0
    %189 = vmatprep.mubr.f32.mxu0 0.0
    %190 = vmatmul.mubr.f32.gmra.mrb[0].mxu0 %v74
    %v191 = vpop.f32.mrb[0].mxu0
    %v192 = vadd.f32 %v64, %v191
    %v193 = vpop.f32.mrb[0].mxu0
    %194 = vmatprep.mubr.f32.mxu0 0.0
    %195 = vmatmul.mubr.f32.gmra.mrb[0].mxu0 %v77
    %v196 = vpop.f32.mrb[0].mxu0
    %v197 = vadd.f32 %v64, %v196
    %v198 = vpop.f32.mrb[0].mxu0
    %199 = vmatprep.mubr.f32.mxu0 0.0
    %200 = vmatmul.mubr.f32.gmra.mrb[0].mxu0 %v80
    %v201 = vpop.f32.mrb[0].mxu0
    %v202 = vadd.f32 %v64, %v201
    %v203 = vpop.f32.mrb[0].mxu0
    %204 = vmatprep.mubr.f32.mxu0 0.0
    %205 = vmatmul.mubr.f32.gmra.mrb[0].mxu0 %v83
    %v206 = vpop.f32.mrb[0].mxu0
    %v207 = vadd.f32 %v64, %v206
    %v208 = vpop.f32.mrb[0].mxu0
    %209 = vmatprep.mubr.f32.mxu0 0.0
    %210 = vmatmul.mubr.f32.gmra.mrb[0].mxu0 %v86
    %v211 = vpop.f32.mrb[0].mxu0
    %v212 = vadd.f32 %v64, %v211
    %v213 = vpop.f32.mrb[0].mxu0
    %214 = vmatprep.mubr.f32.mxu0 0.0
    %215 = vmatmul.mubr.f32.gmra.mrb[0].mxu0 %v89
    %v216 = vpop.f32.mrb[0].mxu0
    %v217 = vadd.f32 %v64, %v216
    %v218 = vpop.f32.mrb[0].mxu0
    %219 = vmatprep.mubr.f32.mxu0 0.0
    %220 = vmatmul.mubr.f32.gmra.mrb[0].mxu0 %v92
    %v221 = vpop.f32.mrb[0].mxu0
    %v222 = vadd.f32 %v64, %v221
    %v223 = vpop.f32.mrb[0].mxu0
    %224 = vmatprep.mubr.f32.mxu0 0.0
    %225 = vmatmul.mubr.f32.gmra.mrb[0].mxu0 %v95
    %v226 = vpop.f32.mrb[0].mxu0
    %v227 = vadd.f32 %v64, %v226
    %v228 = vpop.f32.mrb[0].mxu0
    %229 = vmatprep.mubr.f32.mxu0 0.0
    %230 = vmatmul.mubr.f32.gmra.mrb[0].mxu0 %v98
    %v231 = vpop.f32.mrb[0].mxu0
    %v232 = vadd.f32 %v64, %v231
    %v233 = vpop.f32.mrb[0].mxu0
    %234 = vmatprep.mubr.f32.mxu0 0.0
    %235 = vmatmul.mubr.f32.gmra.mrb[0].mxu0 %v101
    %v236 = vpop.f32.mrb[0].mxu0
    %v237 = vadd.f32 %v64, %v236
    %v238 = vpop.f32.mrb[0].mxu0
    %239 = vmatprep.mubr.f32.mxu0 0.0
    %240 = vmatmul.mubr.f32.gmra.mrb[0].mxu0 %v104
    %v241 = vpop.f32.mrb[0].mxu0
    %v242 = vadd.f32 %v64, %v241
    %v243 = vpop.f32.mrb[0].mxu0
    %244 = vmatprep.mubr.f32.mxu0 0.0
    %245 = vmatmul.mubr.f32.gmra.mrb[0].mxu0 %v107
    %v246 = vpop.f32.mrb[0].mxu0
    %v247 = vadd.f32 %v64, %v246
    %v248 = vpop.f32.mrb[0].mxu0
    %249 = vmatprep.mubr.f32.mxu0 0.0
    %250 = vmatmul.mubr.f32.gmra.mrb[0].mxu0 %v110
    %v251 = vpop.f32.mrb[0].mxu0
    %v252 = vadd.f32 %v64, %v251
    %v253 = vpop.f32.mrb[0].mxu0
    %254 = vmatprep.mubr.f32.mxu0 0.0
    %255 = vmatmul.mubr.f32.gmra.mrb[0].mxu0 %v113
    %v256 = vpop.f32.mrb[0].mxu0
    %v257 = vadd.f32 %v64, %v256
    %v258 = vpop.f32.mrb[0].mxu0
    %259 = vdwg.mxu0
    %v260 = vmax.f32 %v182, 0.0
    %v261 = vmax.f32 %v187, 0.0
    %v262 = vmax.f32 %v192, 0.0
    %v263 = vmax.f32 %v197, 0.0
    %v264 = vmax.f32 %v202, 0.0
    %v265 = vmax.f32 %v207, 0.0
    %v266 = vmax.f32 %v212, 0.0
    %v267 = vmax.f32 %v217, 0.0
    %v268 = vmax.f32 %v222, 0.0
    %v269 = vmax.f32 %v227, 0.0
    %v270 = vmax.f32 %v232, 0.0
    %v271 = vmax.f32 %v237, 0.0
    %v272 = vmax.f32 %v242, 0.0
    %v273 = vmax.f32 %v247, 0.0
    %v274 = vmax.f32 %v252, 0.0
    %v275 = vmax.f32 %v257, 0.0
    %v276 = vld [vmem:[%s3] sm:$0xff]
    %v277 = vld [vmem:[%s3 + $0x8] sm:$0xff]
    %v278 = vld [vmem:[%s3 + $0x10] sm:$0xff]
    %v279 = vld [vmem:[%s3 + $0x18] sm:$0xff]
    %v280 = vld [vmem:[%s3 + $0x20] sm:$0xff]
    %v281 = vld [vmem:[%s3 + $0x28] sm:$0xff]
    %v282 = vld [vmem:[%s3 + $0x30] sm:$0xff]
    %v283 = vld [vmem:[%s3 + $0x38] sm:$0xff]
    %v284 = vld [vmem:[%s3 + $0x40] sm:$0xff]
    %v285 = vld [vmem:[%s3 + $0x48] sm:$0xff]
    %v286 = vld [vmem:[%s3 + $0x50] sm:$0xff]
    %v287 = vld [vmem:[%s3 + $0x58] sm:$0xff]
    %v288 = vld [vmem:[%s3 + $0x60] sm:$0xff]
    %v289 = vld [vmem:[%s3 + $0x68] sm:$0xff]
    %v290 = vld [vmem:[%s3 + $0x70] sm:$0xff]
    %v291 = vld [vmem:[%s3 + $0x78] sm:$0xff]
    %v292 = vld [vmem:[%s4] sm:$0x1]
    %v294 = vlaneseq
    %v295 = vshrl.u32 %v294, 7
    %v296 = vsub.s32 0, %v295
    %v297 = vrot.slane %v292, %v296
    %299 = vmatprep.subr.mxu0 0.0
    %300 = vmatpush1.msra.mxu0 %v276
    %301 = vmatprep.subr.mxu0 0.0
    %302 = vmatpush1.msra.mxu0 %v277
    %303 = vmatprep.subr.mxu0 0.0
    %304 = vmatpush1.msra.mxu0 %v278
    %305 = vmatprep.subr.mxu0 0.0
    %306 = vmatpush1.msra.mxu0 %v279
    %307 = vmatprep.subr.mxu0 0.0
    %308 = vmatpush1.msra.mxu0 %v280
    %309 = vmatprep.subr.mxu0 0.0
    %310 = vmatpush1.msra.mxu0 %v281
    %311 = vmatprep.subr.mxu0 0.0
    %312 = vmatpush1.msra.mxu0 %v282
    %313 = vmatprep.subr.mxu0 0.0
    %314 = vmatpush1.msra.mxu0 %v283
    %315 = vmatprep.subr.mxu0 0.0
    %316 = vmatpush1.msra.mxu0 %v284
    %317 = vmatprep.subr.mxu0 0.0
    %318 = vmatpush1.msra.mxu0 %v285
    %319 = vmatprep.subr.mxu0 0.0
    %320 = vmatpush1.msra.mxu0 %v286
    %321 = vmatprep.subr.mxu0 0.0
    %322 = vmatpush1.msra.mxu0 %v287
    %323 = vmatprep.subr.mxu0 0.0
    %324 = vmatpush1.msra.mxu0 %v288
    %325 = vmatprep.subr.mxu0 0.0
    %326 = vmatpush1.msra.mxu0 %v289
    %327 = vmatprep.subr.mxu0 0.0
    %328 = vmatpush1.msra.mxu0 %v290
    %329 = vmatprep.subr.mxu0 0.0
    %330 = vmatpush1.msra.mxu0 %v291
    %331 = vmatprep.subr.mxu0 0.0
    %332 = vmatpush1.msra.mxu0 0.0
    %333 = vmatprep.subr.mxu0 0.0
    %334 = vmatpush1.msra.mxu0 0.0
    %335 = vmatprep.subr.mxu0 0.0
    %336 = vmatpush1.msra.mxu0 0.0
    %337 = vmatprep.subr.mxu0 0.0
    %338 = vmatpush1.msra.mxu0 0.0
    %339 = vmatprep.subr.mxu0 0.0
    %340 = vmatpush1.msra.mxu0 0.0
    %341 = vmatprep.subr.mxu0 0.0
    %342 = vmatpush1.msra.mxu0 0.0
    %343 = vmatprep.subr.mxu0 0.0
    %344 = vmatpush1.msra.mxu0 0.0
    %345 = vmatprep.subr.mxu0 0.0
    %346 = vmatpush1.msra.mxu0 0.0
    %347 = vmatprep.subr.mxu0 0.0
    %348 = vmatpush1.msra.mxu0 0.0
    %349 = vmatprep.subr.mxu0 0.0
    %350 = vmatpush1.msra.mxu0 0.0
    %351 = vmatprep.subr.mxu0 0.0
    %352 = vmatpush1.msra.mxu0 0.0
    %353 = vmatprep.subr.mxu0 0.0
    %354 = vmatpush1.msra.mxu0 0.0
    %355 = vmatprep.subr.mxu0 0.0
    %356 = vmatpush1.msra.mxu0 0.0
    %357 = vmatprep.subr.mxu0 0.0
    %358 = vmatpush1.msra.mxu0 0.0
    %359 = vmatprep.subr.mxu0 0.0
    %360 = vmatpush1.msra.mxu0 0.0
    %361 = vmatprep.subr.mxu0 0.0
    %362 = vmatpush1.msra.mxu0 0.0
    %363 = vmatprep.mubr.f32.mxu0 0.0
    %364 = vmatmul.mubr.f32.gmra.mrb[0].mxu0 %v260
    %v365 = vpop.f32.mrb[0].mxu0
    %v366 = vadd.f32 %v297, %v365
    %v367 = vpop.f32.mrb[0].mxu0
    %368 = vmatprep.mubr.f32.mxu0 0.0
    %369 = vmatmul.mubr.f32.gmra.mrb[0].mxu0 %v261
    %v370 = vpop.f32.mrb[0].mxu0
    %v371 = vadd.f32 %v297, %v370
    %v372 = vpop.f32.mrb[0].mxu0
    %373 = vmatprep.mubr.f32.mxu0 0.0
    %374 = vmatmul.mubr.f32.gmra.mrb[0].mxu0 %v262
    %v375 = vpop.f32.mrb[0].mxu0
    %v376 = vadd.f32 %v297, %v375
    %v377 = vpop.f32.mrb[0].mxu0
    %378 = vmatprep.mubr.f32.mxu0 0.0
    %379 = vmatmul.mubr.f32.gmra.mrb[0].mxu0 %v263
    %v380 = vpop.f32.mrb[0].mxu0
    %v381 = vadd.f32 %v297, %v380
    %v382 = vpop.f32.mrb[0].mxu0
    %383 = vmatprep.mubr.f32.mxu0 0.0
    %384 = vmatmul.mubr.f32.gmra.mrb[0].mxu0 %v264
    %v385 = vpop.f32.mrb[0].mxu0
    %v386 = vadd.f32 %v297, %v385
    %v387 = vpop.f32.mrb[0].mxu0
    %388 = vmatprep.mubr.f32.mxu0 0.0
    %389 = vmatmul.mubr.f32.gmra.mrb[0].mxu0 %v265
    %v390 = vpop.f32.mrb[0].mxu0
    %v391 = vadd.f32 %v297, %v390
    %v392 = vpop.f32.mrb[0].mxu0
    %393 = vmatprep.mubr.f32.mxu0 0.0
    %394 = vmatmul.mubr.f32.gmra.mrb[0].mxu0 %v266
    %v395 = vpop.f32.mrb[0].mxu0
    %v396 = vadd.f32 %v297, %v395
    %v397 = vpop.f32.mrb[0].mxu0
    %398 = vmatprep.mubr.f32.mxu0 0.0
    %399 = vmatmul.mubr.f32.gmra.mrb[0].mxu0 %v267
    %v400 = vpop.f32.mrb[0].mxu0
    %v401 = vadd.f32 %v297, %v400
    %v402 = vpop.f32.mrb[0].mxu0
    %403 = vmatprep.mubr.f32.mxu0 0.0
    %404 = vmatmul.mubr.f32.gmra.mrb[0].mxu0 %v268
    %v405 = vpop.f32.mrb[0].mxu0
    %v406 = vadd.f32 %v297, %v405
    %v407 = vpop.f32.mrb[0].mxu0
    %408 = vmatprep.mubr.f32.mxu0 0.0
    %409 = vmatmul.mubr.f32.gmra.mrb[0].mxu0 %v269
    %v410 = vpop.f32.mrb[0].mxu0
    %v411 = vadd.f32 %v297, %v410
    %v412 = vpop.f32.mrb[0].mxu0
    %413 = vmatprep.mubr.f32.mxu0 0.0
    %414 = vmatmul.mubr.f32.gmra.mrb[0].mxu0 %v270
    %v415 = vpop.f32.mrb[0].mxu0
    %v416 = vadd.f32 %v297, %v415
    %v417 = vpop.f32.mrb[0].mxu0
    %418 = vmatprep.mubr.f32.mxu0 0.0
    %419 = vmatmul.mubr.f32.gmra.mrb[0].mxu0 %v271
    %v420 = vpop.f32.mrb[0].mxu0
    %v421 = vadd.f32 %v297, %v420
    %v422 = vpop.f32.mrb[0].mxu0
    %423 = vmatprep.mubr.f32.mxu0 0.0
    %424 = vmatmul.mubr.f32.gmra.mrb[0].mxu0 %v272
    %v425 = vpop.f32.mrb[0].mxu0
    %v426 = vadd.f32 %v297, %v425
    %v427 = vpop.f32.mrb[0].mxu0
    %428 = vmatprep.mubr.f32.mxu0 0.0
    %429 = vmatmul.mubr.f32.gmra.mrb[0].mxu0 %v273
    %v430 = vpop.f32.mrb[0].mxu0
    %v431 = vadd.f32 %v297, %v430
    %v432 = vpop.f32.mrb[0].mxu0
    %433 = vmatprep.mubr.f32.mxu0 0.0
    %434 = vmatmul.mubr.f32.gmra.mrb[0].mxu0 %v274
    %v435 = vpop.f32.mrb[0].mxu0
    %v436 = vadd.f32 %v297, %v435
    %v437 = vpop.f32.mrb[0].mxu0
    %438 = vmatprep.mubr.f32.mxu0 0.0
    %439 = vmatmul.mubr.f32.gmra.mrb[0].mxu0 %v275
    %v440 = vpop.f32.mrb[0].mxu0
    %v441 = vadd.f32 %v297, %v440
    %v442 = vpop.f32.mrb[0].mxu0
    %443 = vdwg.mxu0
    %v444 = vmax.f32 %v366, 0.0
    %v445 = vmax.f32 %v371, 0.0
    %v446 = vmax.f32 %v376, 0.0
    %v447 = vmax.f32 %v381, 0.0
    %v448 = vmax.f32 %v386, 0.0
    %v449 = vmax.f32 %v391, 0.0
    %v450 = vmax.f32 %v396, 0.0
    %v451 = vmax.f32 %v401, 0.0
    %v452 = vmax.f32 %v406, 0.0
    %v453 = vmax.f32 %v411, 0.0
    %v454 = vmax.f32 %v416, 0.0
    %v455 = vmax.f32 %v421, 0.0
    %v456 = vmax.f32 %v426, 0.0
    %v457 = vmax.f32 %v431, 0.0
    %v458 = vmax.f32 %v436, 0.0
    %v459 = vmax.f32 %v441, 0.0
    %v460 = vld [vmem:[#allocation2] sm:$0xff]
    %v461 = vld [vmem:[#allocation2 + $0x8] sm:$0xff]
    %v462 = vld [vmem:[#allocation2 + $0x10] sm:$0xff]
    %v463 = vld [vmem:[#allocation2 + $0x18] sm:$0xff]
    %v464 = vld [vmem:[#allocation2 + $0x20] sm:$0xff]
    %v465 = vld [vmem:[#allocation2 + $0x28] sm:$0xff]
    %v466 = vld [vmem:[#allocation2 + $0x30] sm:$0xff]
    %v467 = vld [vmem:[#allocation2 + $0x38] sm:$0xff]
    %v468 = vld [vmem:[#allocation2 + $0x40] sm:$0xff]
    %v469 = vld [vmem:[#allocation2 + $0x48] sm:$0xff]
    %v470 = vld [vmem:[#allocation2 + $0x50] sm:$0xff]
    %v471 = vld [vmem:[#allocation2 + $0x58] sm:$0xff]
    %v472 = vld [vmem:[#allocation2 + $0x60] sm:$0xff]
    %v473 = vld [vmem:[#allocation2 + $0x68] sm:$0xff]
    %v474 = vld [vmem:[#allocation2 + $0x70] sm:$0xff]
    %v475 = vld [vmem:[#allocation2 + $0x78] sm:$0xff]
    %v476 = vld [vmem:[%s6] sm:$0x1]
    %v478 = vlaneseq
    %v479 = vshrl.u32 %v478, 7
    %v480 = vsub.s32 0, %v479
    %v481 = vrot.slane %v476, %v480
    %483 = vmatprep.subr.mxu0 0.0
    %484 = vmatpush1.msra.mxu0 %v460
    %485 = vmatprep.subr.mxu0 0.0
    %486 = vmatpush1.msra.mxu0 %v461
    %487 = vmatprep.subr.mxu0 0.0
    %488 = vmatpush1.msra.mxu0 %v462
    %489 = vmatprep.subr.mxu0 0.0
    %490 = vmatpush1.msra.mxu0 %v463
    %491 = vmatprep.subr.mxu0 0.0
    %492 = vmatpush1.msra.mxu0 %v464
    %493 = vmatprep.subr.mxu0 0.0
    %494 = vmatpush1.msra.mxu0 %v465
    %495 = vmatprep.subr.mxu0 0.0
    %496 = vmatpush1.msra.mxu0 %v466
    %497 = vmatprep.subr.mxu0 0.0
    %498 = vmatpush1.msra.mxu0 %v467
    %499 = vmatprep.subr.mxu0 0.0
    %500 = vmatpush1.msra.mxu0 %v468
    %501 = vmatprep.subr.mxu0 0.0
    %502 = vmatpush1.msra.mxu0 %v469
    %503 = vmatprep.subr.mxu0 0.0
    %504 = vmatpush1.msra.mxu0 %v470
    %505 = vmatprep.subr.mxu0 0.0
    %506 = vmatpush1.msra.mxu0 %v471
    %507 = vmatprep.subr.mxu0 0.0
    %508 = vmatpush1.msra.mxu0 %v472
    %509 = vmatprep.subr.mxu0 0.0
    %510 = vmatpush1.msra.mxu0 %v473
    %511 = vmatprep.subr.mxu0 0.0
    %512 = vmatpush1.msra.mxu0 %v474
    %513 = vmatprep.subr.mxu0 0.0
    %514 = vmatpush1.msra.mxu0 %v475
    %515 = vmatprep.subr.mxu0 0.0
    %516 = vmatpush1.msra.mxu0 0.0
    %517 = vmatprep.subr.mxu0 0.0
    %518 = vmatpush1.msra.mxu0 0.0
    %519 = vmatprep.subr.mxu0 0.0
    %520 = vmatpush1.msra.mxu0 0.0
    %521 = vmatprep.subr.mxu0 0.0
    %522 = vmatpush1.msra.mxu0 0.0
    %523 = vmatprep.subr.mxu0 0.0
    %524 = vmatpush1.msra.mxu0 0.0
    %525 = vmatprep.subr.mxu0 0.0
    %526 = vmatpush1.msra.mxu0 0.0
    %527 = vmatprep.subr.mxu0 0.0
    %528 = vmatpush1.msra.mxu0 0.0
    %529 = vmatprep.subr.mxu0 0.0
    %530 = vmatpush1.msra.mxu0 0.0
    %531 = vmatprep.subr.mxu0 0.0
    %532 = vmatpush1.msra.mxu0 0.0
    %533 = vmatprep.subr.mxu0 0.0
    %534 = vmatpush1.msra.mxu0 0.0
    %535 = vmatprep.subr.mxu0 0.0
    %536 = vmatpush1.msra.mxu0 0.0
    %537 = vmatprep.subr.mxu0 0.0
    %538 = vmatpush1.msra.mxu0 0.0
    %539 = vmatprep.subr.mxu0 0.0
    %540 = vmatpush1.msra.mxu0 0.0
    %541 = vmatprep.subr.mxu0 0.0
    %542 = vmatpush1.msra.mxu0 0.0
    %543 = vmatprep.subr.mxu0 0.0
    %544 = vmatpush1.msra.mxu0 0.0
    %545 = vmatprep.subr.mxu0 0.0
    %546 = vmatpush1.msra.mxu0 0.0
    %547 = vmatprep.mubr.f32.mxu0 0.0
    %548 = vmatmul.mubr.f32.gmra.mrb[0].mxu0 %v444
    %v549 = vpop.f32.mrb[0].mxu0
    %v550 = vadd.f32 %v481, %v549
    %v551 = vpop.f32.mrb[0].mxu0
    %552 = vmatprep.mubr.f32.mxu0 0.0
    %553 = vmatmul.mubr.f32.gmra.mrb[0].mxu0 %v445
    %v554 = vpop.f32.mrb[0].mxu0
    %v555 = vadd.f32 %v481, %v554
    %v556 = vpop.f32.mrb[0].mxu0
    %557 = vmatprep.mubr.f32.mxu0 0.0
    %558 = vmatmul.mubr.f32.gmra.mrb[0].mxu0 %v446
    %v559 = vpop.f32.mrb[0].mxu0
    %v560 = vadd.f32 %v481, %v559
    %v561 = vpop.f32.mrb[0].mxu0
    %562 = vmatprep.mubr.f32.mxu0 0.0
    %563 = vmatmul.mubr.f32.gmra.mrb[0].mxu0 %v447
    %v564 = vpop.f32.mrb[0].mxu0
    %v565 = vadd.f32 %v481, %v564
    %v566 = vpop.f32.mrb[0].mxu0
    %567 = vmatprep.mubr.f32.mxu0 0.0
    %568 = vmatmul.mubr.f32.gmra.mrb[0].mxu0 %v448
    %v569 = vpop.f32.mrb[0].mxu0
    %v570 = vadd.f32 %v481, %v569
    %v571 = vpop.f32.mrb[0].mxu0
    %572 = vmatprep.mubr.f32.mxu0 0.0
    %573 = vmatmul.mubr.f32.gmra.mrb[0].mxu0 %v449
    %v574 = vpop.f32.mrb[0].mxu0
    %v575 = vadd.f32 %v481, %v574
    %v576 = vpop.f32.mrb[0].mxu0
    %577 = vmatprep.mubr.f32.mxu0 0.0
    %578 = vmatmul.mubr.f32.gmra.mrb[0].mxu0 %v450
    %v579 = vpop.f32.mrb[0].mxu0
    %v580 = vadd.f32 %v481, %v579
    %v581 = vpop.f32.mrb[0].mxu0
    %582 = vmatprep.mubr.f32.mxu0 0.0
    %583 = vmatmul.mubr.f32.gmra.mrb[0].mxu0 %v451
    %v584 = vpop.f32.mrb[0].mxu0
    %v585 = vadd.f32 %v481, %v584
    %v586 = vpop.f32.mrb[0].mxu0
    %587 = vmatprep.mubr.f32.mxu0 0.0
    %588 = vmatmul.mubr.f32.gmra.mrb[0].mxu0 %v452
    %v589 = vpop.f32.mrb[0].mxu0
    %v590 = vadd.f32 %v481, %v589
    %v591 = vpop.f32.mrb[0].mxu0
    %592 = vmatprep.mubr.f32.mxu0 0.0
    %593 = vmatmul.mubr.f32.gmra.mrb[0].mxu0 %v453
    %v594 = vpop.f32.mrb[0].mxu0
    %v595 = vadd.f32 %v481, %v594
    %v596 = vpop.f32.mrb[0].mxu0
    %597 = vmatprep.mubr.f32.mxu0 0.0
    %598 = vmatmul.mubr.f32.gmra.mrb[0].mxu0 %v454
    %v599 = vpop.f32.mrb[0].mxu0
    %v600 = vadd.f32 %v481, %v599
    %v601 = vpop.f32.mrb[0].mxu0
    %602 = vmatprep.mubr.f32.mxu0 0.0
    %603 = vmatmul.mubr.f32.gmra.mrb[0].mxu0 %v455
    %v604 = vpop.f32.mrb[0].mxu0
    %v605 = vadd.f32 %v481, %v604
    %v606 = vpop.f32.mrb[0].mxu0
    %607 = vmatprep.mubr.f32.mxu0 0.0
    %608 = vmatmul.mubr.f32.gmra.mrb[0].mxu0 %v456
    %v609 = vpop.f32.mrb[0].mxu0
    %v610 = vadd.f32 %v481, %v609
    %v611 = vpop.f32.mrb[0].mxu0
    %612 = vmatprep.mubr.f32.mxu0 0.0
    %613 = vmatmul.mubr.f32.gmra.mrb[0].mxu0 %v457
    %v614 = vpop.f32.mrb[0].mxu0
    %v615 = vadd.f32 %v481, %v614
    %v616 = vpop.f32.mrb[0].mxu0
    %617 = vmatprep.mubr.f32.mxu0 0.0
    %618 = vmatmul.mubr.f32.gmra.mrb[0].mxu0 %v458
    %v619 = vpop.f32.mrb[0].mxu0
    %v620 = vadd.f32 %v481, %v619
    %v621 = vpop.f32.mrb[0].mxu0
    %622 = vmatprep.mubr.f32.mxu0 0.0
    %623 = vmatmul.mubr.f32.gmra.mrb[0].mxu0 %v459
    %v624 = vpop.f32.mrb[0].mxu0
    %v625 = vadd.f32 %v481, %v624
    %v626 = vpop.f32.mrb[0].mxu0
    %627 = vdwg.mxu0
    %628 = vxpose.xlu0.b32.start [1/16] %v550, 128
    %629 = vxpose.xlu0.b32.cont [2/16] %v555, 128
    %630 = vxpose.xlu0.b32.cont [3/16] %v560, 128
    %631 = vxpose.xlu0.b32.cont [4/16] %v565, 128
    %632 = vxpose.xlu0.b32.cont [5/16] %v570, 128
    %633 = vxpose.xlu0.b32.cont [6/16] %v575, 128
    %634 = vxpose.xlu0.b32.cont [7/16] %v580, 128
    %635 = vxpose.xlu0.b32.cont [8/16] %v585, 128
    %636 = vxpose.xlu0.b32.cont [9/16] %v590, 128
    %637 = vxpose.xlu0.b32.cont [10/16] %v595, 128
    %638 = vxpose.xlu0.b32.cont [11/16] %v600, 128
    %639 = vxpose.xlu0.b32.cont [12/16] %v605, 128
    %640 = vxpose.xlu0.b32.cont [13/16] %v610, 128
    %641 = vxpose.xlu0.b32.cont [14/16] %v615, 128
    %642 = vxpose.xlu0.b32.cont [15/16] %v620, 128
    %643 = vxpose.xlu0.b32.end [16/16] %v625, 128
    %v644 = vpop.trf.xlu0
    %v645 = vpop.trf.xlu0
    %v646 = vpop.trf.xlu0
    %v647 = vpop.trf.xlu0
    %v648 = vpop.trf.xlu0
    %v649 = vpop.trf.xlu0
    %v650 = vpop.trf.xlu0
    %v651 = vpop.trf.xlu0
    %v652 = vpop.trf.xlu0
    %v653 = vpop.trf.xlu0
    %v654 = vpop.trf.xlu0
    %v655 = vpop.trf.xlu0
    %v656 = vpop.trf.xlu0
    %v657 = vpop.trf.xlu0
    %v658 = vpop.trf.xlu0
    %v659 = vpop.trf.xlu0
    %660 = vst [vmem:[#allocation5] sm:$0xff] %v644
    // Predicated region
    $region34: #{tpu_custom_call.1} parent=1 // pred_check
      _
    $region35: #{tpu_custom_call.1} parent=1 // pred_check_branch
      %662 = sbr.rel (0) target = $region37
    $region36: #{tpu_custom_call.1} parent=1 // pred_region
      %s664 = ssub.s32 128, 128
      %665 = vsyncadd [#allocation4], %s664
      %s667 = sshll.u32 [#allocation5], 4
      %s668 = int_to_ptr.vmem [resolvable:$true] %s667
      %670 = dma.vmem_to_hbm [thread:$0]  %s668, 128, %s7, [#allocation4]
    $region37: #{tpu_custom_call.1} parent=1 // pred_fallthru
      _
    // Predicated region
    $region38: #{tpu_custom_call.1} parent=1 // pred_check
      _
    $region39: #{tpu_custom_call.1} parent=1 // pred_check_branch
      %672 = sbr.rel (0) target = $region41
    $region40: #{tpu_custom_call.1} parent=1 // pred_region
      %673 = dma.done [#allocation4], 128
    $region41: #{tpu_custom_call.1} parent=1 // pred_fallthru
      _
    %674 = vsyncpa [#allocation3], 1
    %675 = vsyncpa [#allocation4], 1

</llo_original>
